<compile_context>
chip_gen: v5e
topology: v5e:2x2
jax: 0.10.0
libtpu: 0.0.40
codegen_flags: <defaults>
</compile_context>

<pallas_src>
import jax
import jax.numpy as jnp
from jax.experimental import pallas as pl
from jax.experimental.pallas import tpu as pltpu

_LANES = 128
_MAX_BLOCK_ROWS = 4096     # (4096, 128) f32 block = 2 MiB; 2 inputs x 2 bufs = 8 MiB VMEM
_NUM_COUNTS = 5            # [tp@0.5, pp@0.5, tp@0.0, pp@0.0, out_of_[0,1] count]


def _make_precision_kernel(block_rows, total_rows, needs_mask):
    """Kernel counting TP / predicted-positives at both thresholds + range check."""

    def kernel(out_ref, lab_ref, counts_ref):
        i = pl.program_id(0)

        @pl.when(i == 0)
        def _():
            for k in range(_NUM_COUNTS):
                counts_ref[k] = 0

        x = out_ref[...]                      # native dtype, no wrapper cast
        lab_true = lab_ref[...] > 0.5

        preds_prob = x > 0.5                  # torchmetrics threshold on probabilities
        preds_logit = x > 0.0                 # == sigmoid(x) > 0.5 for logit inputs
        oob = (x < 0.0) | (x > 1.0)           # "not all in [0,1]" detection, fused

        if needs_mask:                        # static Python branch: only if last tile is partial
            row = i * block_rows + jax.lax.broadcasted_iota(
                jnp.int32, (block_rows, _LANES), 0)
            valid = row < total_rows
            preds_prob = preds_prob & valid
            preds_logit = preds_logit & valid
            oob = oob & valid

        counts_ref[0] += jnp.sum((preds_prob & lab_true).astype(jnp.int32))
        counts_ref[1] += jnp.sum(preds_prob.astype(jnp.int32))
        counts_ref[2] += jnp.sum((preds_logit & lab_true).astype(jnp.int32))
        counts_ref[3] += jnp.sum(preds_logit.astype(jnp.int32))
        counts_ref[4] += jnp.sum(oob.astype(jnp.int32))

    return kernel


def top1_precision(outputs, labels):
    """JAX/Pallas equivalent of Top1Precision.forward (BinaryPrecision, top_k=1)."""
    flat_o = outputs.reshape(-1)
    flat_l = labels.reshape(-1)
    n = flat_o.shape[0]

    # Lane-pad to a multiple of 128 only when needed.  Zero padding is neutral:
    # it yields pred=False at both thresholds and is inside [0, 1].
    rem = n % _LANES
    if rem:
        pad = _LANES - rem
        flat_o = jnp.pad(flat_o, (0, pad))
        flat_l = jnp.pad(flat_l, (0, pad))

    o2 = flat_o.reshape(-1, _LANES)
    l2 = flat_l.reshape(-1, _LANES)
    total_rows = o2.shape[0]

    # Largest row-tile that fits comfortably in VMEM; a full-extent block is
    # always layout-legal for small inputs.
    block_rows = min(_MAX_BLOCK_ROWS, total_rows)
    num_tiles = pl.cdiv(total_rows, block_rows)
    needs_mask = (total_rows % block_rows) != 0

    kernel = _make_precision_kernel(block_rows, total_rows, needs_mask)

    counts = pl.pallas_call(
        kernel,
        out_shape=jax.ShapeDtypeStruct((_NUM_COUNTS,), jnp.int32),
        grid_spec=pltpu.PrefetchScalarGridSpec(
            num_scalar_prefetch=0,
            grid=(num_tiles,),
            in_specs=[
                pl.BlockSpec((block_rows, _LANES), lambda i: (i, 0)),
                pl.BlockSpec((block_rows, _LANES), lambda i: (i, 0)),
            ],
            out_specs=pl.BlockSpec(memory_space=pltpu.MemorySpace.SMEM),
        ),
        compiler_params=pltpu.CompilerParams(
            dimension_semantics=("arbitrary",)),
    )(o2, l2)

    is_prob = counts[4] == 0          # all elements in [0, 1] -> treat as probabilities
    tp = jnp.where(is_prob, counts[0], counts[2]).astype(jnp.float32)
    pp = jnp.where(is_prob, counts[1], counts[3]).astype(jnp.float32)
    # precision = tp / (tp + fp) = tp / predicted_positives; 0 when pp == 0.
    return jnp.where(pp > 0, tp / jnp.maximum(pp, 1.0), jnp.float32(0.0))


def _reference(outputs, labels):
    outputs = outputs.astype(jnp.float32)
    is_prob = jnp.all((outputs >= 0.0) & (outputs <= 1.0))
    outputs = jnp.where(is_prob, outputs, jax.nn.sigmoid(outputs))
    preds = outputs > 0.5
    labs = labels.astype(jnp.float32) > 0.5
    tp = jnp.sum((preds & labs).astype(jnp.float32))
    fp = jnp.sum((preds & ~labs).astype(jnp.float32))
    denom = tp + fp
    return jnp.where(denom > 0, tp / jnp.maximum(denom, 1.0), jnp.float32(0.0))


if __name__ == "__main__":
    key = jax.random.PRNGKey(0)
    k1, k2, k3 = jax.random.split(key, 3)

    # Small NCHW-like predictions/labels (the module flattens everything anyway).
    labels = (jax.random.uniform(k2, (2, 4, 16, 16)) > 0.5).astype(jnp.float32)

    # Case 1: probability-valued predictions (threshold 0.5 path).
    outputs_prob = jax.random.uniform(k1, (2, 4, 16, 16), dtype=jnp.float32)
    prec_prob = top1_precision(outputs_prob, labels)
    jax.block_until_ready(prec_prob)
    assert jnp.allclose(prec_prob, _reference(outputs_prob, labels), atol=1e-6), (
        prec_prob, _reference(outputs_prob, labels))

    # Case 2: logit-valued predictions (sigmoid / x>0 path).
    outputs_logit = 3.0 * jax.random.normal(k3, (2, 4, 16, 16), dtype=jnp.float32)
    prec_logit = top1_precision(outputs_logit, labels)
    jax.block_until_ready(prec_logit)
    assert jnp.allclose(prec_logit, _reference(outputs_logit, labels), atol=1e-6), (
        prec_logit, _reference(outputs_logit, labels))

    print("KERNEL_OK")
</pallas_src>

<mosaic_0001>
module attributes {stable_mosaic.version = 11 : i64} {
  func.func @kernel(%arg0: i32, %arg1: memref<16x128xf32, #tpu.memory_space<vmem>>, %arg2: memref<16x128xf32, #tpu.memory_space<vmem>>, %arg3: memref<5xi32, #tpu.memory_space<smem>>) attributes {dimension_semantics = [#tpu.dimension_semantics<arbitrary>], iteration_bounds = array<i64: 1>, scalar_prefetch = 0 : i64, scratch_operands = 0 : i64, tpu.core_type = #tpu.core_type<tc>, window_params = [{transform_indices = @transform_0, window_bounds = array<i64: 16, 128>}, {transform_indices = @transform_1, window_bounds = array<i64: 16, 128>}, {transform_indices = @transform_2, window_bounds = array<i64: 5>}]} {
    %c0_i32 = arith.constant 0 : i32
    %0 = arith.cmpi eq, %arg0, %c0_i32 : i32
    %1 = arith.extui %0 : i1 to i32
    %c0_i32_0 = arith.constant 0 : i32
    %2 = arith.cmpi ne, %1, %c0_i32_0 : i32
    scf.if %2 {
      %c0_i32_19 = arith.constant 0 : i32
      %c0_20 = arith.constant 0 : index
      %58 = memref.load %arg3[%c0_20] : memref<5xi32, #tpu.memory_space<smem>>
      memref.store %c0_i32_19, %arg3[%c0_20] : memref<5xi32, #tpu.memory_space<smem>>
      %c0_i32_21 = arith.constant 0 : i32
      %c1_22 = arith.constant 1 : index
      %59 = memref.load %arg3[%c1_22] : memref<5xi32, #tpu.memory_space<smem>>
      memref.store %c0_i32_21, %arg3[%c1_22] : memref<5xi32, #tpu.memory_space<smem>>
      %c0_i32_23 = arith.constant 0 : i32
      %c2_24 = arith.constant 2 : index
      %60 = memref.load %arg3[%c2_24] : memref<5xi32, #tpu.memory_space<smem>>
      memref.store %c0_i32_23, %arg3[%c2_24] : memref<5xi32, #tpu.memory_space<smem>>
      %c0_i32_25 = arith.constant 0 : i32
      %c3_26 = arith.constant 3 : index
      %61 = memref.load %arg3[%c3_26] : memref<5xi32, #tpu.memory_space<smem>>
      memref.store %c0_i32_25, %arg3[%c3_26] : memref<5xi32, #tpu.memory_space<smem>>
      %c0_i32_27 = arith.constant 0 : i32
      %c4_28 = arith.constant 4 : index
      %62 = memref.load %arg3[%c4_28] : memref<5xi32, #tpu.memory_space<smem>>
      memref.store %c0_i32_27, %arg3[%c4_28] : memref<5xi32, #tpu.memory_space<smem>>
    } else {
    }
    %c0 = arith.constant 0 : index
    %c0_1 = arith.constant 0 : index
    %3 = vector.load %arg1[%c0, %c0_1] : memref<16x128xf32, #tpu.memory_space<vmem>>, vector<16x128xf32>
    %c0_2 = arith.constant 0 : index
    %c0_3 = arith.constant 0 : index
    %4 = vector.load %arg2[%c0_2, %c0_3] : memref<16x128xf32, #tpu.memory_space<vmem>>, vector<16x128xf32>
    %cst = arith.constant 5.000000e-01 : f32
    %5 = vector.broadcast %cst : f32 to vector<16x128xf32>
    %6 = arith.cmpf ogt, %4, %5 : vector<16x128xf32>
    %cst_4 = arith.constant 5.000000e-01 : f32
    %7 = vector.broadcast %cst_4 : f32 to vector<16x128xf32>
    %8 = arith.cmpf ogt, %3, %7 : vector<16x128xf32>
    %cst_5 = arith.constant 0.000000e+00 : f32
    %9 = vector.broadcast %cst_5 : f32 to vector<16x128xf32>
    %10 = arith.cmpf ogt, %3, %9 : vector<16x128xf32>
    %cst_6 = arith.constant 0.000000e+00 : f32
    %11 = vector.broadcast %cst_6 : f32 to vector<16x128xf32>
    %12 = arith.cmpf olt, %3, %11 : vector<16x128xf32>
    %cst_7 = arith.constant 1.000000e+00 : f32
    %13 = vector.broadcast %cst_7 : f32 to vector<16x128xf32>
    %14 = arith.cmpf ogt, %3, %13 : vector<16x128xf32>
    %15 = arith.ori %12, %14 : vector<16x128xi1>
    %c0_8 = arith.constant 0 : index
    %16 = memref.load %arg3[%c0_8] : memref<5xi32, #tpu.memory_space<smem>>
    %17 = arith.andi %8, %6 : vector<16x128xi1>
    %18 = arith.extui %17 : vector<16x128xi1> to vector<16x128xi32>
    %19 = vector.shape_cast %18 : vector<16x128xi32> to vector<1x16x128xi32>
    %cst_9 = arith.constant dense<0> : vector<1xi32>
    %20 = vector.multi_reduction <add>, %19, %cst_9 [1, 2] : vector<1x16x128xi32> to vector<1xi32>
    %21 = vector.shape_cast %20 : vector<1xi32> to vector<1x1x1xi32>
    %22 = vector.extract %21[0, 0, 0] : i32 from vector<1x1x1xi32>
    %23 = arith.addi %16, %22 : i32
    %c0_10 = arith.constant 0 : index
    %24 = memref.load %arg3[%c0_10] : memref<5xi32, #tpu.memory_space<smem>>
    memref.store %23, %arg3[%c0_10] : memref<5xi32, #tpu.memory_space<smem>>
    %c1 = arith.constant 1 : index
    %25 = memref.load %arg3[%c1] : memref<5xi32, #tpu.memory_space<smem>>
    %26 = arith.extui %8 : vector<16x128xi1> to vector<16x128xi32>
    %27 = vector.shape_cast %26 : vector<16x128xi32> to vector<1x16x128xi32>
    %cst_11 = arith.constant dense<0> : vector<1xi32>
    %28 = vector.multi_reduction <add>, %27, %cst_11 [1, 2] : vector<1x16x128xi32> to vector<1xi32>
    %29 = vector.shape_cast %28 : vector<1xi32> to vector<1x1x1xi32>
    %30 = vector.extract %29[0, 0, 0] : i32 from vector<1x1x1xi32>
    %31 = arith.addi %25, %30 : i32
    %c1_12 = arith.constant 1 : index
    %32 = memref.load %arg3[%c1_12] : memref<5xi32, #tpu.memory_space<smem>>
    memref.store %31, %arg3[%c1_12] : memref<5xi32, #tpu.memory_space<smem>>
    %c2 = arith.constant 2 : index
    %33 = memref.load %arg3[%c2] : memref<5xi32, #tpu.memory_space<smem>>
    %34 = arith.andi %10, %6 : vector<16x128xi1>
    %35 = arith.extui %34 : vector<16x128xi1> to vector<16x128xi32>
    %36 = vector.shape_cast %35 : vector<16x128xi32> to vector<1x16x128xi32>
    %cst_13 = arith.constant dense<0> : vector<1xi32>
    %37 = vector.multi_reduction <add>, %36, %cst_13 [1, 2] : vector<1x16x128xi32> to vector<1xi32>
    %38 = vector.shape_cast %37 : vector<1xi32> to vector<1x1x1xi32>
    %39 = vector.extract %38[0, 0, 0] : i32 from vector<1x1x1xi32>
    %40 = arith.addi %33, %39 : i32
    %c2_14 = arith.constant 2 : index
    %41 = memref.load %arg3[%c2_14] : memref<5xi32, #tpu.memory_space<smem>>
    memref.store %40, %arg3[%c2_14] : memref<5xi32, #tpu.memory_space<smem>>
    %c3 = arith.constant 3 : index
    %42 = memref.load %arg3[%c3] : memref<5xi32, #tpu.memory_space<smem>>
    %43 = arith.extui %10 : vector<16x128xi1> to vector<16x128xi32>
    %44 = vector.shape_cast %43 : vector<16x128xi32> to vector<1x16x128xi32>
    %cst_15 = arith.constant dense<0> : vector<1xi32>
    %45 = vector.multi_reduction <add>, %44, %cst_15 [1, 2] : vector<1x16x128xi32> to vector<1xi32>
    %46 = vector.shape_cast %45 : vector<1xi32> to vector<1x1x1xi32>
    %47 = vector.extract %46[0, 0, 0] : i32 from vector<1x1x1xi32>
    %48 = arith.addi %42, %47 : i32
    %c3_16 = arith.constant 3 : index
    %49 = memref.load %arg3[%c3_16] : memref<5xi32, #tpu.memory_space<smem>>
    memref.store %48, %arg3[%c3_16] : memref<5xi32, #tpu.memory_space<smem>>
    %c4 = arith.constant 4 : index
    %50 = memref.load %arg3[%c4] : memref<5xi32, #tpu.memory_space<smem>>
    %51 = arith.extui %15 : vector<16x128xi1> to vector<16x128xi32>
    %52 = vector.shape_cast %51 : vector<16x128xi32> to vector<1x16x128xi32>
    %cst_17 = arith.constant dense<0> : vector<1xi32>
    %53 = vector.multi_reduction <add>, %52, %cst_17 [1, 2] : vector<1x16x128xi32> to vector<1xi32>
    %54 = vector.shape_cast %53 : vector<1xi32> to vector<1x1x1xi32>
    %55 = vector.extract %54[0, 0, 0] : i32 from vector<1x1x1xi32>
    %56 = arith.addi %50, %55 : i32
    %c4_18 = arith.constant 4 : index
    %57 = memref.load %arg3[%c4_18] : memref<5xi32, #tpu.memory_space<smem>>
    memref.store %56, %arg3[%c4_18] : memref<5xi32, #tpu.memory_space<smem>>
    return
  }
  func.func @transform_0(%arg0: i32) -> (i32, i32) {
    %c0_i32 = arith.constant 0 : i32
    %c0_i32_0 = arith.constant 0 : i32
    return %arg0, %c0_i32 : i32, i32
  }
  func.func @transform_1(%arg0: i32) -> (i32, i32) {
    %c0_i32 = arith.constant 0 : i32
    %c0_i32_0 = arith.constant 0 : i32
    return %arg0, %c0_i32 : i32, i32
  }
  func.func @transform_2(%arg0: i32) -> i32 {
    %c0_i32 = arith.constant 0 : i32
    %c0_i32_0 = arith.constant 0 : i32
    return %c0_i32 : i32
  }
}

</mosaic_0001>

<llo_original>
// kernel: tpu_custom_call.1
$region0: #{tpu_custom_call.1}
  #allocation0 [shape = 'u32[]', space=smem, size = 0x4, offset = 0x4, fixed_abs, tag = 'smem constant byte address 0x4 - core index']
  #allocation1 [shape = 'u32[72,128]{1,0:T(1,128)}', space=vmem, size = 0x9000, scoped, tag = 'internal scratch']
  %s0 = inlined_call_operand.hbm [shape: f32[16,128], index: 0, kind: input, shape index: {}]
  %s1 = inlined_call_operand.hbm [shape: f32[16,128], index: 1, kind: input, shape index: {}]
  %s2 = inlined_call_operand.hbm [shape: s32[5], index: 2, kind: output, shape index: {}]
  %s3 = sld [smem:[#allocation0]]
  $region30: #{tpu_custom_call.1} parent=0
    _
  %s5 = ssub.s32 1, %s3
  %s6 = scalar_select 0, %s5, %s3
  $region1: #{tpu_custom_call.1} parent=0
    #allocation2 [shape = 'u8[8192]{0}', space=vmem, size = 0x2000, scoped, tag = 'input window, operand 0, single buffered']
    #allocation3 [shape = 's32[1]{0}', space=sflag, size = 0x4, scoped, tag = 'scoped memory for tpu_custom_call.1']
    #allocation4 [shape = 's32[1]{0}', space=sflag, size = 0x4, scoped, tag = 'scoped memory for tpu_custom_call.1']
    #allocation5 [shape = 'u8[8192]{0}', space=vmem, size = 0x2000, scoped, tag = 'input window, operand 1, single buffered']
    #allocation6 [shape = 's32[1]{0}', space=sflag, size = 0x4, scoped, tag = 'scoped memory for tpu_custom_call.1']
    #allocation7 [shape = 'u8[512]{0}', space=smem, size = 0x200, scoped, tag = 'output window, operand 0, single buffered']
    %7 = vsyncpa [#allocation3], 0
    %8 = vsyncpa [#allocation6], 0
    %9 = vsyncpa [#allocation4], 0
    // Predicated region
    $region2: #{tpu_custom_call.1} parent=1 // pred_check
      _
    $region3: #{tpu_custom_call.1} parent=1 // pred_check_branch
      %11 = sbr.rel (0) target = $region5
    $region4: #{tpu_custom_call.1} parent=1 // pred_region
      %13 = vsyncadd [#allocation3], 0
      %s14 = sshll.u32 %s0, 4
      %s15 = int_to_ptr.hbm [resolvable:$true] %s14
      %s16 = sshll.u32 [#allocation2], 4
      %s17 = int_to_ptr.vmem [resolvable:$true] %s16
      %22 = dma.hbm_to_vmem [thread:$0]  %s15, 256, %s17, [#allocation3], 128, 128, 8
    $region5: #{tpu_custom_call.1} parent=1 // pred_fallthru
      _
    // Predicated region
    $region6: #{tpu_custom_call.1} parent=1 // pred_check
      _
    $region7: #{tpu_custom_call.1} parent=1 // pred_check_branch
      %24 = sbr.rel (0) target = $region9
    $region8: #{tpu_custom_call.1} parent=1 // pred_region
      %26 = vsyncadd [#allocation6], 0
      %s27 = sshll.u32 %s1, 4
      %s28 = int_to_ptr.hbm [resolvable:$true] %s27
      %s29 = sshll.u32 [#allocation5], 4
      %s30 = int_to_ptr.vmem [resolvable:$true] %s29
      %35 = dma.hbm_to_vmem [thread:$0]  %s28, 256, %s30, [#allocation6], 128, 128, 8
    $region9: #{tpu_custom_call.1} parent=1 // pred_fallthru
      _
    // Predicated region
    $region10: #{tpu_custom_call.1} parent=1 // pred_check
      _
    $region11: #{tpu_custom_call.1} parent=1 // pred_check_branch
      %37 = sbr.rel (0) target = $region13
    $region12: #{tpu_custom_call.1} parent=1 // pred_region
      %39 = dma.done [#allocation3], 256
    $region13: #{tpu_custom_call.1} parent=1 // pred_fallthru
      _
    // Predicated region
    $region14: #{tpu_custom_call.1} parent=1 // pred_check
      _
    $region15: #{tpu_custom_call.1} parent=1 // pred_check_branch
      %41 = sbr.rel (0) target = $region17
    $region16: #{tpu_custom_call.1} parent=1 // pred_region
      %43 = dma.done [#allocation6], 256
    $region17: #{tpu_custom_call.1} parent=1 // pred_fallthru
      _
    %p44 = scmp.eq.s32.totalorder 0, 0
    // Predicated region
    $region18: #{tpu_custom_call.1} parent=1 // pred_check
      %p45 = pneg %p44
    $region19: #{tpu_custom_call.1} parent=1 // pred_check_branch
      %47 = sbr.rel (%p45) target = $region21
    $region20: #{tpu_custom_call.1} parent=1 // pred_region
      %s48 = scalar_lea.smem [#allocation7], 0
      %49 = sst [smem:[%s48]] 0
      %s50 = scalar_lea.smem [#allocation7], 1
      %51 = sst [smem:[%s50]] 0
      %s52 = scalar_lea.smem [#allocation7], 2
      %53 = sst [smem:[%s52]] 0
      %s54 = scalar_lea.smem [#allocation7], 3
      %55 = sst [smem:[%s54]] 0
      %s56 = scalar_lea.smem [#allocation7], 4
      %57 = sst [smem:[%s56]] 0
    $region21: #{tpu_custom_call.1} parent=1 // pred_fallthru
      _
    %v58 = vld [vmem:[#allocation2] sm:$0xff]
    %v59 = vld [vmem:[#allocation2 + $0x8] sm:$0xff]
    %v60 = vld [vmem:[#allocation5] sm:$0xff]
    %v61 = vld [vmem:[#allocation5 + $0x8] sm:$0xff]
    %vm62 = vcmp.gt.f32.partialorder %v60, 0.5
    %vm63 = vcmp.gt.f32.partialorder %v61, 0.5
    %vm64 = vcmp.gt.f32.partialorder %v58, 0.5
    %vm65 = vcmp.gt.f32.partialorder %v59, 0.5
    %vm66 = vcmp.gt.f32.partialorder %v58, 0.0
    %vm67 = vcmp.gt.f32.partialorder %v59, 0.0
    %vm68 = vcmp.lt.f32.partialorder %v58, 0.0
    %vm69 = vcmp.lt.f32.partialorder %v59, 0.0
    %vm70 = vcmp.gt.f32.partialorder %v58, 1.0
    %vm71 = vcmp.gt.f32.partialorder %v59, 1.0
    %vm72 = vmor %vm68, %vm70
    %vm73 = vmor %vm69, %vm71
    %s74 = sld [smem:[#allocation7]]
    %vm75 = vmand %vm64, %vm62
    %vm76 = vmand %vm65, %vm63
    %v77 = vsel %vm75, 1, 0
    %v78 = vsel %vm76, 1, 0
    %v79 = vadd.s32 %v77, %v78
    %v80 = vand.u32 %v79, 65535
    %v81 = vshrl.u32 %v79, 16
    %v82 = vcvt.s32.f32 %v80
    %v83 = vcvt.s32.f32 %v81
    %84 = vadd.xlane.f32.xlu0 %v82
    %v85 = vpop.xlane.xlu0 %84
    %86 = vadd.xlane.f32.xlu0 %v83
    %v87 = vpop.xlane.xlu0 %86
    %v88 = vcvt.f32.s32 %v85
    %v89 = vcvt.f32.s32 %v87
    %v90 = vshll.u32 %v89, 16
    %v91 = vadd.s32 %v90, %v88
    %v92 = vrot.slane %v91, 4
    %v93 = vadd.s32 %v91, %v92
    %v94 = vrot.slane %v93, 2
    %v95 = vadd.s32 %v93, %v94
    %v96 = vrot.slane %v95, 1
    %v97 = vadd.s32 %v95, %v96
    %s98 = vtos %v97
    %s99 = sadd.s32 %s74, %s98
    %s100 = scalar_lea.smem [#allocation7], 0
    %101 = sst [smem:[%s100]] %s99
    %s102 = sld [smem:[#allocation7 + $0x1]]
    %v103 = vsel %vm64, 1, 0
    %v104 = vsel %vm65, 1, 0
    %v105 = vadd.s32 %v103, %v104
    %v106 = vand.u32 %v105, 65535
    %v107 = vshrl.u32 %v105, 16
    %v108 = vcvt.s32.f32 %v106
    %v109 = vcvt.s32.f32 %v107
    %110 = vadd.xlane.f32.xlu0 %v108
    %v111 = vpop.xlane.xlu0 %110
    %112 = vadd.xlane.f32.xlu0 %v109
    %v113 = vpop.xlane.xlu0 %112
    %v114 = vcvt.f32.s32 %v111
    %v115 = vcvt.f32.s32 %v113
    %v116 = vshll.u32 %v115, 16
    %v117 = vadd.s32 %v116, %v114
    %v118 = vrot.slane %v117, 4
    %v119 = vadd.s32 %v117, %v118
    %v120 = vrot.slane %v119, 2
    %v121 = vadd.s32 %v119, %v120
    %v122 = vrot.slane %v121, 1
    %v123 = vadd.s32 %v121, %v122
    %s124 = vtos %v123
    %s125 = sadd.s32 %s102, %s124
    %s126 = scalar_lea.smem [#allocation7], 1
    %127 = sst [smem:[%s126]] %s125
    %s128 = sld [smem:[#allocation7 + $0x2]]
    %vm129 = vmand %vm66, %vm62
    %vm130 = vmand %vm67, %vm63
    %v131 = vsel %vm129, 1, 0
    %v132 = vsel %vm130, 1, 0
    %v133 = vadd.s32 %v131, %v132
    %v134 = vand.u32 %v133, 65535
    %v135 = vshrl.u32 %v133, 16
    %v136 = vcvt.s32.f32 %v134
    %v137 = vcvt.s32.f32 %v135
    %138 = vadd.xlane.f32.xlu0 %v136
    %v139 = vpop.xlane.xlu0 %138
    %140 = vadd.xlane.f32.xlu0 %v137
    %v141 = vpop.xlane.xlu0 %140
    %v142 = vcvt.f32.s32 %v139
    %v143 = vcvt.f32.s32 %v141
    %v144 = vshll.u32 %v143, 16
    %v145 = vadd.s32 %v144, %v142
    %v146 = vrot.slane %v145, 4
    %v147 = vadd.s32 %v145, %v146
    %v148 = vrot.slane %v147, 2
    %v149 = vadd.s32 %v147, %v148
    %v150 = vrot.slane %v149, 1
    %v151 = vadd.s32 %v149, %v150
    %s152 = vtos %v151
    %s153 = sadd.s32 %s128, %s152
    %s154 = scalar_lea.smem [#allocation7], 2
    %155 = sst [smem:[%s154]] %s153
    %s156 = sld [smem:[#allocation7 + $0x3]]
    %v157 = vsel %vm66, 1, 0
    %v158 = vsel %vm67, 1, 0
    %v159 = vadd.s32 %v157, %v158
    %v160 = vand.u32 %v159, 65535
    %v161 = vshrl.u32 %v159, 16
    %v162 = vcvt.s32.f32 %v160
    %v163 = vcvt.s32.f32 %v161
    %164 = vadd.xlane.f32.xlu0 %v162
    %v165 = vpop.xlane.xlu0 %164
    %166 = vadd.xlane.f32.xlu0 %v163
    %v167 = vpop.xlane.xlu0 %166
    %v168 = vcvt.f32.s32 %v165
    %v169 = vcvt.f32.s32 %v167
    %v170 = vshll.u32 %v169, 16
    %v171 = vadd.s32 %v170, %v168
    %v172 = vrot.slane %v171, 4
    %v173 = vadd.s32 %v171, %v172
    %v174 = vrot.slane %v173, 2
    %v175 = vadd.s32 %v173, %v174
    %v176 = vrot.slane %v175, 1
    %v177 = vadd.s32 %v175, %v176
    %s178 = vtos %v177
    %s179 = sadd.s32 %s156, %s178
    %s180 = scalar_lea.smem [#allocation7], 3
    %181 = sst [smem:[%s180]] %s179
    %s182 = sld [smem:[#allocation7 + $0x4]]
    %v183 = vsel %vm72, 1, 0
    %v184 = vsel %vm73, 1, 0
    %v185 = vadd.s32 %v183, %v184
    %v186 = vand.u32 %v185, 65535
    %v187 = vshrl.u32 %v185, 16
    %v188 = vcvt.s32.f32 %v186
    %v189 = vcvt.s32.f32 %v187
    %190 = vadd.xlane.f32.xlu0 %v188
    %v191 = vpop.xlane.xlu0 %190
    %192 = vadd.xlane.f32.xlu0 %v189
    %v193 = vpop.xlane.xlu0 %192
    %v194 = vcvt.f32.s32 %v191
    %v195 = vcvt.f32.s32 %v193
    %v196 = vshll.u32 %v195, 16
    %v197 = vadd.s32 %v196, %v194
    %v198 = vrot.slane %v197, 4
    %v199 = vadd.s32 %v197, %v198
    %v200 = vrot.slane %v199, 2
    %v201 = vadd.s32 %v199, %v200
    %v202 = vrot.slane %v201, 1
    %v203 = vadd.s32 %v201, %v202
    %s204 = vtos %v203
    %s205 = sadd.s32 %s182, %s204
    %s206 = scalar_lea.smem [#allocation7], 4
    %207 = sst [smem:[%s206]] %s205
    // Predicated region
    $region22: #{tpu_custom_call.1} parent=1 // pred_check
      _
    $region23: #{tpu_custom_call.1} parent=1 // pred_check_branch
      %209 = sbr.rel (0) target = $region25
    $region24: #{tpu_custom_call.1} parent=1 // pred_region
      %211 = vsyncadd [#allocation4], 0
      %s213 = sshll.u32 %s2, 4
      %s214 = int_to_ptr.hbm [resolvable:$true] %s213
      %216 = dma.smem_to_hbm [#allocation7], 16, %s214, [#allocation4]
    $region25: #{tpu_custom_call.1} parent=1 // pred_fallthru
      _
    // Predicated region
    $region26: #{tpu_custom_call.1} parent=1 // pred_check
      _
    $region27: #{tpu_custom_call.1} parent=1 // pred_check_branch
      %218 = sbr.rel (0) target = $region29
    $region28: #{tpu_custom_call.1} parent=1 // pred_region
      %220 = dma.done [#allocation4], 16
    $region29: #{tpu_custom_call.1} parent=1 // pred_fallthru
      _
    %221 = sfence
    %222 = vsyncpa [#allocation3], 1
    %223 = vsyncpa [#allocation6], 1
    %224 = vsyncpa [#allocation4], 1

</llo_original>
